<compile_context>
chip_gen: v7x
topology: tpu7x:2x2x1
jax: 0.10.0
libtpu: 0.0.40
codegen_flags: <defaults>
</compile_context>

<pallas_src>
import functools
import math

import jax
import jax.numpy as jnp
from jax.experimental import pallas as pl
from jax.experimental.pallas import tpu as pltpu


# --------------------------------------------------------------------------- #
# Kernel
# --------------------------------------------------------------------------- #
def _gc_attn_kernel(b_mask_ref,          # SMEM (1,) f32   : Conv1d(C->1) bias
                    x_ref,               # VMEM (C, TN)    : input tile (f32/bf16)
                    wm_ref,              # VMEM (C, 1) f32 : Conv1d(C->1) weight
                    w1_ref,              # VMEM (2,C,D) f32 (VPU) or (2,D,C) (MXU)
                    w2_ref,              # VMEM (2,C,D) f32
                    vec_ref,             # VMEM (2,3,D) f32 (VPU) or (2,3,D,1) (MXU)
                    b2_ref,              # VMEM (2,C,1) f32
                    o_ref,               # VMEM (C, TN)    : output tile
                    m_scr, s_scr, ctx_scr, add_scr, mul_scr,
                    *, nt, use_mxu):
    phase = pl.program_id(1)             # 0 = pool + channel MLPs, 1 = apply
    t = pl.program_id(2)                 # spatial tile index

    # All math in f32 regardless of I/O dtype (bf16 I/O only halves HBM bytes).
    x = x_ref[...].astype(jnp.float32)   # (C, TN)

    # --------- phase 0: attention pooling (online softmax over the N tiles) ---
    @pl.when(phase == 0)
    def _pool():
        @pl.when(t == 0)
        def _init():
            m_scr[...] = jnp.full_like(m_scr, -jnp.inf)
            s_scr[...] = jnp.zeros_like(s_scr)
            ctx_scr[...] = jnp.zeros_like(ctx_scr)

        logits = (jnp.sum(x * wm_ref[...], axis=0, keepdims=True)
                  + b_mask_ref[0])                                    # (1, TN)
        m_prev = m_scr[...]                                           # (1, 1)
        m_new = jnp.maximum(m_prev, jnp.max(logits, axis=-1, keepdims=True))
        alpha = jnp.exp(m_prev - m_new)                               # (1, 1)
        e = jnp.exp(logits - m_new)                                   # (1, TN)
        s_scr[...] = alpha * s_scr[...] + jnp.sum(e, axis=-1, keepdims=True)
        # un-normalized context: sum_n x[:, n] * e[n]   -> (C, 1)
        ctx_scr[...] = alpha * ctx_scr[...] + jnp.sum(x * e, axis=-1, keepdims=True)
        m_scr[...] = m_new

        # last spatial tile of this batch: finish the softmax and run both MLPs
        @pl.when(t == nt - 1)
        def _channel_mlps():
            # Normalize once on the tiny (C,1) vector instead of the (1,N) row.
            # (Exact divide on a (1,1) scalar keeps the strict f32 tolerance;
            #  pl.reciprocal(approx=True) would also work at ~1e-4 accuracy.)
            ctx = ctx_scr[...] * (1.0 / s_scr[...])                   # (C, 1)

            def branch(i):
                w1 = w1_ref[i]
                w2 = w2_ref[i]
                b2 = b2_ref[i]                                        # (C, 1)
                if use_mxu:
                    # large C,D: plain (no-transpose) MXU matvecs, f32 accumulate
                    v = vec_ref[i]                                    # (3, D, 1)
                    b1, g, be = v[0], v[1], v[2]                      # (D, 1) each
                    h = jnp.dot(w1, ctx,                              # (D,C)@(C,1)
                                preferred_element_type=jnp.float32) + b1
                    mu = jnp.mean(h, axis=0, keepdims=True)
                    var = jnp.mean((h - mu) ** 2, axis=0, keepdims=True)
                    h = (h - mu) * jax.lax.rsqrt(var + 1e-5) * g + be
                    h = jnp.maximum(h, 0.0)
                    out = jnp.dot(w2, h,                              # (C,D)@(D,1)
                                  preferred_element_type=jnp.float32)
                else:
                    # small C,D: broadcast-multiply + reductions on VPU/XLU
                    v = vec_ref[i]                                    # (3, D)
                    b1, g, be = v[0:1], v[1:2], v[2:3]                # (1, D) each
                    h = jnp.sum(w1 * ctx, axis=0, keepdims=True) + b1  # (1, D)
                    mu = jnp.mean(h, axis=-1, keepdims=True)
                    var = jnp.mean((h - mu) ** 2, axis=-1, keepdims=True)
                    h = (h - mu) * jax.lax.rsqrt(var + 1e-5) * g + be
                    h = jnp.maximum(h, 0.0)
                    out = jnp.sum(w2 * h, axis=-1, keepdims=True)      # (C, 1)
                return out + b2

            add_scr[...] = branch(0)
            mul_scr[...] = jax.nn.sigmoid(branch(1))

    # --------- phase 1: broadcast apply over the lane-dense spatial tiles -----
    @pl.when(phase == 1)
    def _apply():
        o_ref[...] = (x * mul_scr[...] + add_scr[...]).astype(o_ref.dtype)


# --------------------------------------------------------------------------- #
# Planning: spatial tile + VMEM limit from the real block footprint
# --------------------------------------------------------------------------- #
def _round_up(v, m):
    return -(-v // m) * m


def _vmem_plan(C, N, D, io_itemsize, use_mxu):
    f32 = 4
    # resident packed parameters (pipeline may keep 2 buffers per input)
    wm_b = _round_up(C, 8) * 128 * f32
    w_b = 2 * 2 * _round_up(C, 8) * _round_up(D, 128) * f32           # W1 + W2
    vec_b = (2 * 3 * _round_up(D, 8) * 128 * f32) if use_mxu \
        else (2 * 8 * _round_up(D, 128) * f32)
    b2_b = 2 * _round_up(C, 8) * 128 * f32
    param_bytes = 2 * (wm_b + w_b + vec_b + b2_b)
    scratch_bytes = (3 * _round_up(C, 8) + 2 * 8) * 128 * f32

    try:
        cap = int(pltpu.get_tpu_info().vmem_capacity_bytes)
    except Exception:
        cap = 128 * 1024 * 1024
    budget = int(cap * 0.85)          # ~108 MiB on v5e/v6e, ~54 MiB on v7x

    def tile_bytes(tn):
        # x tile + out tile, double-buffered, plus the in-kernel f32 upcast
        return 2 * C * tn * io_itemsize + 2 * C * tn * io_itemsize + C * tn * f32

    avail = budget - param_bytes - scratch_bytes
    tn = N
    if tile_bytes(N) > avail and N % 128 == 0:
        divisors = [c for c in range(128, N, 128) if N % c == 0]
        fitting = [c for c in divisors if tile_bytes(c) <= avail]
        if fitting:
            tn = fitting[-1]
        elif divisors:
            tn = divisors[0]

    needed = param_bytes + scratch_bytes + tile_bytes(tn)
    vmem_limit = max(32 * 1024 * 1024,
                     min(int(cap * 0.9), needed + 4 * 1024 * 1024))
    return tn, int(vmem_limit)


# --------------------------------------------------------------------------- #
# Parameter packing (14 tensors -> 6 arrays; layout chosen per compute path)
# --------------------------------------------------------------------------- #
def _pack_params(params, use_mxu):
    pa, pm = params["add"], params["mul"]
    if use_mxu:
        # native Conv1d layouts so both projections are plain MXU matmuls
        W1 = jnp.stack([pa["w1_t"].T, pm["w1_t"].T])                   # (2, D, C)
        VEC = jnp.swapaxes(jnp.stack([
            jnp.stack([pa["b1"], pa["gamma"], pa["beta"]]),
            jnp.stack([pm["b1"], pm["gamma"], pm["beta"]])]), -1, -2)  # (2, 3, D, 1)
    else:
        W1 = jnp.stack([pa["w1_t"], pm["w1_t"]])                       # (2, C, D)
        VEC = jnp.stack([
            jnp.concatenate([pa["b1"], pa["gamma"], pa["beta"]], axis=0),
            jnp.concatenate([pm["b1"], pm["gamma"], pm["beta"]], axis=0)])  # (2,3,D)
    W2 = jnp.stack([pa["w2"], pm["w2"]])                               # (2, C, D)
    B2 = jnp.stack([pa["b2"], pm["b2"]])                               # (2, C, 1)
    return params["w_mask"], params["b_mask"].reshape(1), W1, W2, VEC, B2


# --------------------------------------------------------------------------- #
# pallas_call wrapper
# --------------------------------------------------------------------------- #
def gc_attn_pallas(flat, params, tile_n=None):
    """flat: (B, C, N) -> (B, C, N); I/O dtype (f32 or bf16) is preserved."""
    B, C, N = flat.shape
    D = params["add"]["w1_t"].shape[1]
    use_mxu = (C >= 128) and (D >= 128)   # MXU matvecs only pay off at large C*D

    tn, vmem_limit = _vmem_plan(C, N, D, flat.dtype.itemsize, use_mxu)
    if tile_n is not None:                # test / tuning override
        tn = tile_n
    assert N % tn == 0, (N, tn)
    nt = N // tn

    w_mask, b_mask, W1, W2, VEC, B2 = _pack_params(params, use_mxu)
    args = (b_mask, flat, w_mask, W1, W2, VEC, B2)

    def full_spec(a):
        nd = a.ndim
        return pl.BlockSpec(a.shape, lambda b, p, t, _nd=nd: (0,) * _nd)

    in_specs = [
        pl.BlockSpec(memory_space=pltpu.MemorySpace.SMEM),             # b_mask scalar
        pl.BlockSpec((None, C, tn), lambda b, p, t: (b, 0, t)),        # x tiles
        full_spec(w_mask), full_spec(W1), full_spec(W2),
        full_spec(VEC), full_spec(B2),
    ]
    # output block is held at tile 0 during the pooling phase (p*t == 0) and only
    # written / advanced during the apply phase -> no garbage write-backs.
    out_spec = pl.BlockSpec((None, C, tn), lambda b, p, t: (b, 0, p * t))

    kernel = functools.partial(_gc_attn_kernel, nt=nt, use_mxu=use_mxu)
    return pl.pallas_call(
        kernel,
        out_shape=jax.ShapeDtypeStruct((B, C, N), flat.dtype),
        grid_spec=pltpu.PrefetchScalarGridSpec(
            num_scalar_prefetch=0,
            grid=(B, 2, nt),
            in_specs=in_specs,
            out_specs=out_spec,
            scratch_shapes=[
                pltpu.VMEM((1, 1), jnp.float32),   # running max
                pltpu.VMEM((1, 1), jnp.float32),   # running sum(exp)
                pltpu.VMEM((C, 1), jnp.float32),   # un-normalized context
                pltpu.VMEM((C, 1), jnp.float32),   # channel_add term
                pltpu.VMEM((C, 1), jnp.float32),   # channel_mul term (post-sigmoid)
            ]),
        compiler_params=pltpu.CompilerParams(
            dimension_semantics=("parallel", "arbitrary", "arbitrary"),
            vmem_limit_bytes=vmem_limit),
    )(*args)


@functools.partial(jax.jit, static_argnames=("tile_n",))
def gc_attn_forward(x, params, tile_n=None):
    """GC_attn forward.  x: (B, C, *spatial) -> same shape & dtype."""
    B, C = x.shape[0], x.shape[1]
    N = math.prod(x.shape[2:])
    flat = x.reshape(B, C, N)             # contiguous reshape, no transpose
    out = gc_attn_pallas(flat, params, tile_n=tile_n)
    return out.reshape(x.shape)


# --------------------------------------------------------------------------- #
# Parameters + pure-JAX reference
# --------------------------------------------------------------------------- #
def init_gc_attn_params(key, in_dim, out_dim=None):
    """Deterministic params matching the PyTorch module shapes (pre-reshaped)."""
    C = in_dim
    D = out_dim if out_dim is not None else in_dim
    ks = jax.random.split(key, 14)

    def branch(k0, k1, k2, k3, k4, k5):
        return dict(
            w1_t=0.3 * jax.random.normal(k0, (C, D), jnp.float32),   # Conv1d(C->D)^T
            b1=0.1 * jax.random.normal(k1, (1, D), jnp.float32),
            gamma=1.0 + 0.1 * jax.random.normal(k2, (1, D), jnp.float32),
            beta=0.1 * jax.random.normal(k3, (1, D), jnp.float32),
            w2=0.3 * jax.random.normal(k4, (C, D), jnp.float32),     # Conv1d(D->C)
            b2=0.1 * jax.random.normal(k5, (C, 1), jnp.float32),
        )

    return dict(
        w_mask=0.5 * jax.random.normal(ks[0], (C, 1), jnp.float32),  # Conv1d(C->1)
        b_mask=0.1 * jax.random.normal(ks[1], (1, 1), jnp.float32),
        add=branch(*ks[2:8]),
        mul=branch(*ks[8:14]),
    )


def gc_attn_reference(x, params):
    """Pure-JAX reference of the same forward (mirrors PyTorch eval-mode math)."""
    B, C = x.shape[0], x.shape[1]
    flat = x.reshape(B, C, -1).astype(jnp.float32)                    # (B, C, N)

    logits = jnp.sum(flat * params["w_mask"][None, :, :], axis=1) \
        + params["b_mask"][0, 0]                                      # (B, N)
    m = jnp.max(logits, axis=-1, keepdims=True)
    e = jnp.exp(logits - m)
    attn = e / jnp.sum(e, axis=-1, keepdims=True)                     # (B, N)
    ctx = jnp.sum(flat * attn[:, None, :], axis=-1)                   # (B, C)

    def channel_mlp(ctx, p):
        h = jnp.sum(ctx[:, :, None] * p["w1_t"][None, :, :], axis=1) + p["b1"]
        mu = jnp.mean(h, axis=-1, keepdims=True)
        var = jnp.mean((h - mu) ** 2, axis=-1, keepdims=True)
        h = (h - mu) * jax.lax.rsqrt(var + 1e-5) * p["gamma"] + p["beta"]
        h = jnp.maximum(h, 0.0)
        return jnp.sum(h[:, None, :] * p["w2"][None, :, :], axis=-1) \
            + p["b2"][:, 0][None, :]                                  # (B, C)

    add_term = channel_mlp(ctx, params["add"])
    mul_term = jax.nn.sigmoid(channel_mlp(ctx, params["mul"]))
    out = flat * mul_term[:, :, None] + add_term[:, :, None]
    return out.reshape(x.shape)


# --------------------------------------------------------------------------- #
# Tests
# --------------------------------------------------------------------------- #
if __name__ == "__main__":
    key = jax.random.PRNGKey(0)
    k_x, k_p, k_x2, k_p2 = jax.random.split(key, 4)

    # --- 1) small shapes, f32, whole-N tile (VPU channel-MLP path) -----------
    B, C, H, W = 2, 4, 16, 16             # in_dim = 4, out_dim = None -> 4, N = 256
    x = jax.random.normal(k_x, (B, C, H, W), jnp.float32)
    params = init_gc_attn_params(k_p, in_dim=C, out_dim=None)
    out = jax.block_until_ready(gc_attn_forward(x, params))
    ref = gc_attn_reference(x, params)
    assert out.shape == x.shape
    assert jnp.allclose(out, ref, atol=1e-4, rtol=1e-4), \
        float(jnp.max(jnp.abs(out - ref)))

    # --- 2) forced N-tiling: exercises the online-softmax two-phase path -----
    out_t = jax.block_until_ready(gc_attn_forward(x, params, tile_n=128))
    assert jnp.allclose(out_t, ref, atol=1e-4, rtol=1e-4), \
        float(jnp.max(jnp.abs(out_t - ref)))

    # --- 3) bf16 I/O (kernel math stays f32; only the store is bf16) ---------
    xb = x.astype(jnp.bfloat16)
    out_b = jax.block_until_ready(gc_attn_forward(xb, params))
    ref_b = gc_attn_reference(xb.astype(jnp.float32), params)
    assert out_b.dtype == jnp.bfloat16
    assert jnp.allclose(out_b.astype(jnp.float32), ref_b, atol=3e-2, rtol=2e-2)

    # --- 4) C, D >= 128: MXU channel-MLP path (tolerance allows MXU bf16 passes)
    Bl, Cl, Hl, Wl = 2, 256, 16, 16
    xl = jax.random.normal(k_x2, (Bl, Cl, Hl, Wl), jnp.float32)
    params_l = init_gc_attn_params(k_p2, in_dim=Cl, out_dim=128)
    out_l = jax.block_until_ready(gc_attn_forward(xl, params_l))
    ref_l = gc_attn_reference(xl, params_l)
    assert jnp.allclose(out_l, ref_l, atol=1e-1, rtol=5e-2), \
        float(jnp.max(jnp.abs(out_l - ref_l)))

    print("KERNEL_OK")
</pallas_src>

<mosaic_0001>
module attributes {stable_mosaic.version = 11 : i64} {
  func.func @_gc_attn_kernel(%arg0: i32, %arg1: i32, %arg2: i32, %arg3: memref<1xf32, #tpu.memory_space<smem>>, %arg4: memref<1x4x256xf32, #tpu.memory_space<vmem>>, %arg5: memref<4x1xf32, #tpu.memory_space<vmem>>, %arg6: memref<2x4x4xf32, #tpu.memory_space<vmem>>, %arg7: memref<2x4x4xf32, #tpu.memory_space<vmem>>, %arg8: memref<2x3x4xf32, #tpu.memory_space<vmem>>, %arg9: memref<2x4x1xf32, #tpu.memory_space<vmem>>, %arg10: memref<1x4x256xf32, #tpu.memory_space<vmem>>, %arg11: memref<1x1xf32, #tpu.memory_space<vmem>>, %arg12: memref<1x1xf32, #tpu.memory_space<vmem>>, %arg13: memref<4x1xf32, #tpu.memory_space<vmem>>, %arg14: memref<4x1xf32, #tpu.memory_space<vmem>>, %arg15: memref<4x1xf32, #tpu.memory_space<vmem>>) attributes {dimension_semantics = [#tpu.dimension_semantics<parallel>, #tpu.dimension_semantics<arbitrary>, #tpu.dimension_semantics<arbitrary>], iteration_bounds = array<i64: 2, 2, 1>, scalar_prefetch = 0 : i64, scratch_operands = 5 : i64, tpu.core_type = #tpu.core_type<tc>, window_params = [{transform_indices = @transform_0, window_bounds = array<i64: 1>}, {transform_indices = @transform_1, window_bounds = array<i64: 1, 4, 256>}, {pipeline_mode = #tpu.pipeline_mode<synchronous>, transform_indices = @transform_2, window_bounds = array<i64: 4, 1>}, {pipeline_mode = #tpu.pipeline_mode<synchronous>, transform_indices = @transform_3, window_bounds = array<i64: 2, 4, 4>}, {pipeline_mode = #tpu.pipeline_mode<synchronous>, transform_indices = @transform_4, window_bounds = array<i64: 2, 4, 4>}, {pipeline_mode = #tpu.pipeline_mode<synchronous>, transform_indices = @transform_5, window_bounds = array<i64: 2, 3, 4>}, {pipeline_mode = #tpu.pipeline_mode<synchronous>, transform_indices = @transform_6, window_bounds = array<i64: 2, 4, 1>}, {transform_indices = @transform_7, window_bounds = array<i64: 1, 4, 256>}]} {
    %c0 = arith.constant 0 : index
    %c0_0 = arith.constant 0 : index
    %c0_1 = arith.constant 0 : index
    %0 = vector.load %arg4[%c0, %c0_0, %c0_1] : memref<1x4x256xf32, #tpu.memory_space<vmem>>, vector<1x4x256xf32>
    %1 = vector.shape_cast %0 : vector<1x4x256xf32> to vector<4x256xf32>
    %c0_i32 = arith.constant 0 : i32
    %2 = arith.cmpi eq, %arg1, %c0_i32 : i32
    %3 = arith.extui %2 : i1 to i32
    %c0_i32_2 = arith.constant 0 : i32
    %4 = arith.cmpi ne, %3, %c0_i32_2 : i32
    scf.if %4 {
      %c0_i32_4 = arith.constant 0 : i32
      %8 = arith.cmpi eq, %arg2, %c0_i32_4 : i32
      %9 = arith.extui %8 : i1 to i32
      %c0_i32_5 = arith.constant 0 : i32
      %10 = arith.cmpi ne, %9, %c0_i32_5 : i32
      scf.if %10 {
        %cst_26 = arith.constant 0xFF800000 : f32
        %47 = vector.broadcast %cst_26 : f32 to vector<1x1xf32>
        %c0_27 = arith.constant 0 : index
        %c0_28 = arith.constant 0 : index
        %48 = vector.load %arg11[%c0_27, %c0_28] : memref<1x1xf32, #tpu.memory_space<vmem>>, vector<1x1xf32>
        tpu.vector_store %arg11[%c0_27, %c0_28], %47 {strides = array<i32>} : memref<1x1xf32, #tpu.memory_space<vmem>>, vector<1x1xf32>,
        %cst_29 = arith.constant 0.000000e+00 : f32
        %49 = vector.broadcast %cst_29 : f32 to vector<1x1xf32>
        %c0_30 = arith.constant 0 : index
        %c0_31 = arith.constant 0 : index
        %50 = vector.load %arg12[%c0_30, %c0_31] : memref<1x1xf32, #tpu.memory_space<vmem>>, vector<1x1xf32>
        tpu.vector_store %arg12[%c0_30, %c0_31], %49 {strides = array<i32>} : memref<1x1xf32, #tpu.memory_space<vmem>>, vector<1x1xf32>,
        %cst_32 = arith.constant 0.000000e+00 : f32
        %51 = vector.broadcast %cst_32 : f32 to vector<4x1xf32>
        %c0_33 = arith.constant 0 : index
        %c0_34 = arith.constant 0 : index
        %52 = vector.load %arg13[%c0_33, %c0_34] : memref<4x1xf32, #tpu.memory_space<vmem>>, vector<4x1xf32>
        tpu.vector_store %arg13[%c0_33, %c0_34], %51 {strides = array<i32>} : memref<4x1xf32, #tpu.memory_space<vmem>>, vector<4x1xf32>,
      } else {
      }
      %c0_6 = arith.constant 0 : index
      %c0_7 = arith.constant 0 : index
      %11 = vector.load %arg5[%c0_6, %c0_7] : memref<4x1xf32, #tpu.memory_space<vmem>>, vector<4x1xf32>
      %12 = vector.broadcast %11 : vector<4x1xf32> to vector<4x256xf32>
      %13 = arith.mulf %1, %12 : vector<4x256xf32>
      %cst = arith.constant dense<0.000000e+00> : vector<256xf32>
      %14 = vector.multi_reduction <add>, %13, %cst [0] : vector<4x256xf32> to vector<256xf32>
      %15 = vector.shape_cast %14 : vector<256xf32> to vector<1x256xf32>
      %c0_8 = arith.constant 0 : index
      %16 = memref.load %arg3[%c0_8] : memref<1xf32, #tpu.memory_space<smem>>
      %17 = vector.broadcast %16 : f32 to vector<1x256xf32>
      %18 = arith.addf %15, %17 : vector<1x256xf32>
      %c0_9 = arith.constant 0 : index
      %c0_10 = arith.constant 0 : index
      %19 = vector.load %arg11[%c0_9, %c0_10] : memref<1x1xf32, #tpu.memory_space<vmem>>, vector<1x1xf32>
      %cst_11 = arith.constant dense<0xFF800000> : vector<1xf32>
      %20 = vector.multi_reduction <maximumf>, %18, %cst_11 [1] : vector<1x256xf32> to vector<1xf32>
      %21 = vector.shape_cast %20 : vector<1xf32> to vector<1x1xf32>
      %22 = arith.maximumf %19, %21 : vector<1x1xf32>
      %23 = arith.subf %19, %22 : vector<1x1xf32>
      %24 = math.exp %23 : vector<1x1xf32>
      %25 = vector.broadcast %22 : vector<1x1xf32> to vector<1x256xf32>
      %26 = arith.subf %18, %25 : vector<1x256xf32>
      %27 = math.exp %26 : vector<1x256xf32>
      %c0_12 = arith.constant 0 : index
      %c0_13 = arith.constant 0 : index
      %28 = vector.load %arg12[%c0_12, %c0_13] : memref<1x1xf32, #tpu.memory_space<vmem>>, vector<1x1xf32>
      %29 = arith.mulf %24, %28 : vector<1x1xf32>
      %cst_14 = arith.constant dense<0.000000e+00> : vector<1xf32>
      %30 = vector.multi_reduction <add>, %27, %cst_14 [1] : vector<1x256xf32> to vector<1xf32>
      %31 = vector.shape_cast %30 : vector<1xf32> to vector<1x1xf32>
      %32 = arith.addf %29, %31 : vector<1x1xf32>
      %c0_15 = arith.constant 0 : index
      %c0_16 = arith.constant 0 : index
      %33 = vector.load %arg12[%c0_15, %c0_16] : memref<1x1xf32, #tpu.memory_space<vmem>>, vector<1x1xf32>
      tpu.vector_store %arg12[%c0_15, %c0_16], %32 {strides = array<i32>} : memref<1x1xf32, #tpu.memory_space<vmem>>, vector<1x1xf32>,
      %c0_17 = arith.constant 0 : index
      %c0_18 = arith.constant 0 : index
      %34 = vector.load %arg13[%c0_17, %c0_18] : memref<4x1xf32, #tpu.memory_space<vmem>>, vector<4x1xf32>
      %35 = vector.broadcast %24 : vector<1x1xf32> to vector<4x1xf32>
      %36 = arith.mulf %35, %34 : vector<4x1xf32>
      %37 = vector.broadcast %27 : vector<1x256xf32> to vector<4x256xf32>
      %38 = arith.mulf %1, %37 : vector<4x256xf32>
      %cst_19 = arith.constant dense<0.000000e+00> : vector<4xf32>
      %39 = vector.multi_reduction <add>, %38, %cst_19 [1] : vector<4x256xf32> to vector<4xf32>
      %40 = vector.shape_cast %39 : vector<4xf32> to vector<4x1xf32>
      %41 = arith.addf %36, %40 : vector<4x1xf32>
      %c0_20 = arith.constant 0 : index
      %c0_21 = arith.constant 0 : index
      %42 = vector.load %arg13[%c0_20, %c0_21] : memref<4x1xf32, #tpu.memory_space<vmem>>, vector<4x1xf32>
      tpu.vector_store %arg13[%c0_20, %c0_21], %41 {strides = array<i32>} : memref<4x1xf32, #tpu.memory_space<vmem>>, vector<4x1xf32>,
      %c0_22 = arith.constant 0 : index
      %c0_23 = arith.constant 0 : index
      %43 = vector.load %arg11[%c0_22, %c0_23] : memref<1x1xf32, #tpu.memory_space<vmem>>, vector<1x1xf32>
      tpu.vector_store %arg11[%c0_22, %c0_23], %22 {strides = array<i32>} : memref<1x1xf32, #tpu.memory_space<vmem>>, vector<1x1xf32>,
      %c0_i32_24 = arith.constant 0 : i32
      %44 = arith.cmpi eq, %arg2, %c0_i32_24 : i32
      %45 = arith.extui %44 : i1 to i32
      %c0_i32_25 = arith.constant 0 : i32
      %46 = arith.cmpi ne, %45, %c0_i32_25 : i32
      scf.if %46 {
        %c0_26 = arith.constant 0 : index
        %c0_27 = arith.constant 0 : index
        %47 = vector.load %arg13[%c0_26, %c0_27] : memref<4x1xf32, #tpu.memory_space<vmem>>, vector<4x1xf32>
        %c0_28 = arith.constant 0 : index
        %c0_29 = arith.constant 0 : index
        %48 = vector.load %arg12[%c0_28, %c0_29] : memref<1x1xf32, #tpu.memory_space<vmem>>, vector<1x1xf32>
        %cst_30 = arith.constant 1.000000e+00 : f32
        %49 = vector.broadcast %cst_30 : f32 to vector<1x1xf32>
        %50 = arith.divf %49, %48 : vector<1x1xf32>
        %51 = vector.broadcast %50 : vector<1x1xf32> to vector<4x1xf32>
        %52 = arith.mulf %47, %51 : vector<4x1xf32>
        %c0_31 = arith.constant 0 : index
        %c0_32 = arith.constant 0 : index
        %c0_33 = arith.constant 0 : index
        %53 = vector.load %arg6[%c0_31, %c0_32, %c0_33] : memref<2x4x4xf32, #tpu.memory_space<vmem>>, vector<1x4x4xf32>
        %54 = vector.shape_cast %53 : vector<1x4x4xf32> to vector<4x4xf32>
        %c0_34 = arith.constant 0 : index
        %c0_35 = arith.constant 0 : index
        %c0_36 = arith.constant 0 : index
        %55 = vector.load %arg7[%c0_34, %c0_35, %c0_36] : memref<2x4x4xf32, #tpu.memory_space<vmem>>, vector<1x4x4xf32>
        %56 = vector.shape_cast %55 : vector<1x4x4xf32> to vector<4x4xf32>
        %c0_37 = arith.constant 0 : index
        %c0_38 = arith.constant 0 : index
        %c0_39 = arith.constant 0 : index
        %57 = vector.load %arg9[%c0_37, %c0_38, %c0_39] : memref<2x4x1xf32, #tpu.memory_space<vmem>>, vector<1x4x1xf32>
        %58 = vector.shape_cast %57 : vector<1x4x1xf32> to vector<4x1xf32>
        %c0_40 = arith.constant 0 : index
        %c0_41 = arith.constant 0 : index
        %c0_42 = arith.constant 0 : index
        %59 = vector.load %arg8[%c0_40, %c0_41, %c0_42] : memref<2x3x4xf32, #tpu.memory_space<vmem>>, vector<1x3x4xf32>
        %60 = vector.shape_cast %59 : vector<1x3x4xf32> to vector<3x4xf32>
        %61 = vector.extract_strided_slice %60 {offsets = [0, 0], sizes = [1, 4], strides = [1, 1]} : vector<3x4xf32> to vector<1x4xf32>
        %62 = vector.extract_strided_slice %60 {offsets = [1, 0], sizes = [1, 4], strides = [1, 1]} : vector<3x4xf32> to vector<1x4xf32>
        %63 = vector.extract_strided_slice %60 {offsets = [2, 0], sizes = [1, 4], strides = [1, 1]} : vector<3x4xf32> to vector<1x4xf32>
        %64 = vector.broadcast %52 : vector<4x1xf32> to vector<4x4xf32>
        %65 = arith.mulf %54, %64 : vector<4x4xf32>
        %cst_43 = arith.constant dense<0.000000e+00> : vector<4xf32>
        %66 = vector.multi_reduction <add>, %65, %cst_43 [0] : vector<4x4xf32> to vector<4xf32>
        %67 = vector.shape_cast %66 : vector<4xf32> to vector<1x4xf32>
        %68 = arith.addf %67, %61 : vector<1x4xf32>
        %cst_44 = arith.constant dense<0.000000e+00> : vector<1xf32>
        %69 = vector.multi_reduction <add>, %68, %cst_44 [1] : vector<1x4xf32> to vector<1xf32>
        %70 = vector.shape_cast %69 : vector<1xf32> to vector<1x1xf32>
        %cst_45 = arith.constant 4.000000e+00 : f32
        %71 = vector.broadcast %cst_45 : f32 to vector<1x1xf32>
        %72 = arith.divf %70, %71 : vector<1x1xf32>
        %73 = vector.broadcast %72 : vector<1x1xf32> to vector<1x4xf32>
        %74 = arith.subf %68, %73 : vector<1x4xf32>
        %75 = arith.mulf %74, %74 : vector<1x4xf32>
        %cst_46 = arith.constant dense<0.000000e+00> : vector<1xf32>
        %76 = vector.multi_reduction <add>, %75, %cst_46 [1] : vector<1x4xf32> to vector<1xf32>
        %77 = vector.shape_cast %76 : vector<1xf32> to vector<1x1xf32>
        %cst_47 = arith.constant 4.000000e+00 : f32
        %78 = vector.broadcast %cst_47 : f32 to vector<1x1xf32>
        %79 = arith.divf %77, %78 : vector<1x1xf32>
        %80 = vector.broadcast %72 : vector<1x1xf32> to vector<1x4xf32>
        %81 = arith.subf %68, %80 : vector<1x4xf32>
        %cst_48 = arith.constant 9.99999974E-6 : f32
        %82 = vector.broadcast %cst_48 : f32 to vector<1x1xf32>
        %83 = arith.addf %79, %82 : vector<1x1xf32>
        %84 = math.rsqrt %83 : vector<1x1xf32>
        %85 = vector.broadcast %84 : vector<1x1xf32> to vector<1x4xf32>
        %86 = arith.mulf %81, %85 : vector<1x4xf32>
        %87 = arith.mulf %86, %62 : vector<1x4xf32>
        %88 = arith.addf %87, %63 : vector<1x4xf32>
        %cst_49 = arith.constant 0.000000e+00 : f32
        %89 = vector.broadcast %cst_49 : f32 to vector<1x4xf32>
        %90 = arith.maximumf %88, %89 : vector<1x4xf32>
        %91 = vector.broadcast %90 : vector<1x4xf32> to vector<4x4xf32>
        %92 = arith.mulf %56, %91 : vector<4x4xf32>
        %cst_50 = arith.constant dense<0.000000e+00> : vector<4xf32>
        %93 = vector.multi_reduction <add>, %92, %cst_50 [1] : vector<4x4xf32> to vector<4xf32>
        %94 = vector.shape_cast %93 : vector<4xf32> to vector<4x1xf32>
        %95 = arith.addf %94, %58 : vector<4x1xf32>
        %c0_51 = arith.constant 0 : index
        %c0_52 = arith.constant 0 : index
        %96 = vector.load %arg14[%c0_51, %c0_52] : memref<4x1xf32, #tpu.memory_space<vmem>>, vector<4x1xf32>
        tpu.vector_store %arg14[%c0_51, %c0_52], %95 {strides = array<i32>} : memref<4x1xf32, #tpu.memory_space<vmem>>, vector<4x1xf32>,
        %c1 = arith.constant 1 : index
        %c0_53 = arith.constant 0 : index
        %c0_54 = arith.constant 0 : index
        %97 = vector.load %arg6[%c1, %c0_53, %c0_54] : memref<2x4x4xf32, #tpu.memory_space<vmem>>, vector<1x4x4xf32>
        %98 = vector.shape_cast %97 : vector<1x4x4xf32> to vector<4x4xf32>
        %c1_55 = arith.constant 1 : index
        %c0_56 = arith.constant 0 : index
        %c0_57 = arith.constant 0 : index
        %99 = vector.load %arg7[%c1_55, %c0_56, %c0_57] : memref<2x4x4xf32, #tpu.memory_space<vmem>>, vector<1x4x4xf32>
        %100 = vector.shape_cast %99 : vector<1x4x4xf32> to vector<4x4xf32>
        %c1_58 = arith.constant 1 : index
        %c0_59 = arith.constant 0 : index
        %c0_60 = arith.constant 0 : index
        %101 = vector.load %arg9[%c1_58, %c0_59, %c0_60] : memref<2x4x1xf32, #tpu.memory_space<vmem>>, vector<1x4x1xf32>
        %102 = vector.shape_cast %101 : vector<1x4x1xf32> to vector<4x1xf32>
        %c1_61 = arith.constant 1 : index
        %c0_62 = arith.constant 0 : index
        %c0_63 = arith.constant 0 : index
        %103 = vector.load %arg8[%c1_61, %c0_62, %c0_63] : memref<2x3x4xf32, #tpu.memory_space<vmem>>, vector<1x3x4xf32>
        %104 = vector.shape_cast %103 : vector<1x3x4xf32> to vector<3x4xf32>
        %105 = vector.extract_strided_slice %104 {offsets = [0, 0], sizes = [1, 4], strides = [1, 1]} : vector<3x4xf32> to vector<1x4xf32>
        %106 = vector.extract_strided_slice %104 {offsets = [1, 0], sizes = [1, 4], strides = [1, 1]} : vector<3x4xf32> to vector<1x4xf32>
        %107 = vector.extract_strided_slice %104 {offsets = [2, 0], sizes = [1, 4], strides = [1, 1]} : vector<3x4xf32> to vector<1x4xf32>
        %108 = vector.broadcast %52 : vector<4x1xf32> to vector<4x4xf32>
        %109 = arith.mulf %98, %108 : vector<4x4xf32>
        %cst_64 = arith.constant dense<0.000000e+00> : vector<4xf32>
        %110 = vector.multi_reduction <add>, %109, %cst_64 [0] : vector<4x4xf32> to vector<4xf32>
        %111 = vector.shape_cast %110 : vector<4xf32> to vector<1x4xf32>
        %112 = arith.addf %111, %105 : vector<1x4xf32>
        %cst_65 = arith.constant dense<0.000000e+00> : vector<1xf32>
        %113 = vector.multi_reduction <add>, %112, %cst_65 [1] : vector<1x4xf32> to vector<1xf32>
        %114 = vector.shape_cast %113 : vector<1xf32> to vector<1x1xf32>
        %cst_66 = arith.constant 4.000000e+00 : f32
        %115 = vector.broadcast %cst_66 : f32 to vector<1x1xf32>
        %116 = arith.divf %114, %115 : vector<1x1xf32>
        %117 = vector.broadcast %116 : vector<1x1xf32> to vector<1x4xf32>
        %118 = arith.subf %112, %117 : vector<1x4xf32>
        %119 = arith.mulf %118, %118 : vector<1x4xf32>
        %cst_67 = arith.constant dense<0.000000e+00> : vector<1xf32>
        %120 = vector.multi_reduction <add>, %119, %cst_67 [1] : vector<1x4xf32> to vector<1xf32>
        %121 = vector.shape_cast %120 : vector<1xf32> to vector<1x1xf32>
        %cst_68 = arith.constant 4.000000e+00 : f32
        %122 = vector.broadcast %cst_68 : f32 to vector<1x1xf32>
        %123 = arith.divf %121, %122 : vector<1x1xf32>
        %124 = vector.broadcast %116 : vector<1x1xf32> to vector<1x4xf32>
        %125 = arith.subf %112, %124 : vector<1x4xf32>
        %cst_69 = arith.constant 9.99999974E-6 : f32
        %126 = vector.broadcast %cst_69 : f32 to vector<1x1xf32>
        %127 = arith.addf %123, %126 : vector<1x1xf32>
        %128 = math.rsqrt %127 : vector<1x1xf32>
        %129 = vector.broadcast %128 : vector<1x1xf32> to vector<1x4xf32>
        %130 = arith.mulf %125, %129 : vector<1x4xf32>
        %131 = arith.mulf %130, %106 : vector<1x4xf32>
        %132 = arith.addf %131, %107 : vector<1x4xf32>
        %cst_70 = arith.constant 0.000000e+00 : f32
        %133 = vector.broadcast %cst_70 : f32 to vector<1x4xf32>
        %134 = arith.maximumf %132, %133 : vector<1x4xf32>
        %135 = vector.broadcast %134 : vector<1x4xf32> to vector<4x4xf32>
        %136 = arith.mulf %100, %135 : vector<4x4xf32>
        %cst_71 = arith.constant dense<0.000000e+00> : vector<4xf32>
        %137 = vector.multi_reduction <add>, %136, %cst_71 [1] : vector<4x4xf32> to vector<4xf32>
        %138 = vector.shape_cast %137 : vector<4xf32> to vector<4x1xf32>
        %139 = arith.addf %138, %102 : vector<4x1xf32>
        %140 = arith.negf %139 : vector<4x1xf32>
        %141 = math.exp %140 : vector<4x1xf32>
        %cst_72 = arith.constant 1.000000e+00 : f32
        %142 = vector.broadcast %cst_72 : f32 to vector<4x1xf32>
        %143 = arith.addf %142, %141 : vector<4x1xf32>
        %144 = arith.divf %142, %143 : vector<4x1xf32>
        %c0_73 = arith.constant 0 : index
        %c0_74 = arith.constant 0 : index
        %145 = vector.load %arg15[%c0_73, %c0_74] : memref<4x1xf32, #tpu.memory_space<vmem>>, vector<4x1xf32>
        tpu.vector_store %arg15[%c0_73, %c0_74], %144 {strides = array<i32>} : memref<4x1xf32, #tpu.memory_space<vmem>>, vector<4x1xf32>,
      } else {
      }
    } else {
    }
    %c1_i32 = arith.constant 1 : i32
    %5 = arith.cmpi eq, %arg1, %c1_i32 : i32
    %6 = arith.extui %5 : i1 to i32
    %c0_i32_3 = arith.constant 0 : i32
    %7 = arith.cmpi ne, %6, %c0_i32_3 : i32
    scf.if %7 {
      %c0_4 = arith.constant 0 : index
      %c0_5 = arith.constant 0 : index
      %8 = vector.load %arg15[%c0_4, %c0_5] : memref<4x1xf32, #tpu.memory_space<vmem>>, vector<4x1xf32>
      %9 = vector.broadcast %8 : vector<4x1xf32> to vector<4x256xf32>
      %10 = arith.mulf %1, %9 : vector<4x256xf32>
      %c0_6 = arith.constant 0 : index
      %c0_7 = arith.constant 0 : index
      %11 = vector.load %arg14[%c0_6, %c0_7] : memref<4x1xf32, #tpu.memory_space<vmem>>, vector<4x1xf32>
      %12 = vector.broadcast %11 : vector<4x1xf32> to vector<4x256xf32>
      %13 = arith.addf %10, %12 : vector<4x256xf32>
      %c0_8 = arith.constant 0 : index
      %c0_9 = arith.constant 0 : index
      %c0_10 = arith.constant 0 : index
      %14 = vector.load %arg10[%c0_8, %c0_9, %c0_10] : memref<1x4x256xf32, #tpu.memory_space<vmem>>, vector<1x4x256xf32>
      %15 = vector.shape_cast %14 : vector<1x4x256xf32> to vector<4x256xf32>
      %16 = vector.shape_cast %13 : vector<4x256xf32> to vector<1x4x256xf32>
      tpu.vector_store %arg10[%c0_8, %c0_9, %c0_10], %16 {strides = array<i32>} : memref<1x4x256xf32, #tpu.memory_space<vmem>>, vector<1x4x256xf32>,
    } else {
    }
    return
  }
  func.func @transform_0(%arg0: i32, %arg1: i32, %arg2: i32) -> i32 {
    %c0_i32 = arith.constant 0 : i32
    %c0_i32_0 = arith.constant 0 : i32
    return %c0_i32 : i32
  }
  func.func @transform_1(%arg0: i32, %arg1: i32, %arg2: i32) -> (i32, i32, i32) {
    %c0_i32 = arith.constant 0 : i32
    %c0_i32_0 = arith.constant 0 : i32
    return %arg0, %c0_i32, %arg2 : i32, i32, i32
  }
  func.func @transform_2(%arg0: i32, %arg1: i32, %arg2: i32) -> (i32, i32) {
    %c0_i32 = arith.constant 0 : i32
    %c0_i32_0 = arith.constant 0 : i32
    %c0_i32_1 = arith.constant 0 : i32
    return %c0_i32, %c0_i32_0 : i32, i32
  }
  func.func @transform_3(%arg0: i32, %arg1: i32, %arg2: i32) -> (i32, i32, i32) {
    %c0_i32 = arith.constant 0 : i32
    %c0_i32_0 = arith.constant 0 : i32
    %c0_i32_1 = arith.constant 0 : i32
    %c0_i32_2 = arith.constant 0 : i32
    return %c0_i32, %c0_i32_0, %c0_i32_1 : i32, i32, i32
  }
  func.func @transform_4(%arg0: i32, %arg1: i32, %arg2: i32) -> (i32, i32, i32) {
    %c0_i32 = arith.constant 0 : i32
    %c0_i32_0 = arith.constant 0 : i32
    %c0_i32_1 = arith.constant 0 : i32
    %c0_i32_2 = arith.constant 0 : i32
    return %c0_i32, %c0_i32_0, %c0_i32_1 : i32, i32, i32
  }
  func.func @transform_5(%arg0: i32, %arg1: i32, %arg2: i32) -> (i32, i32, i32) {
    %c0_i32 = arith.constant 0 : i32
    %c0_i32_0 = arith.constant 0 : i32
    %c0_i32_1 = arith.constant 0 : i32
    %c0_i32_2 = arith.constant 0 : i32
    return %c0_i32, %c0_i32_0, %c0_i32_1 : i32, i32, i32
  }
  func.func @transform_6(%arg0: i32, %arg1: i32, %arg2: i32) -> (i32, i32, i32) {
    %c0_i32 = arith.constant 0 : i32
    %c0_i32_0 = arith.constant 0 : i32
    %c0_i32_1 = arith.constant 0 : i32
    %c0_i32_2 = arith.constant 0 : i32
    return %c0_i32, %c0_i32_0, %c0_i32_1 : i32, i32, i32
  }
  func.func @transform_7(%arg0: i32, %arg1: i32, %arg2: i32) -> (i32, i32, i32) {
    %0 = arith.muli %arg1, %arg2 : i32
    %c0_i32 = arith.constant 0 : i32
    %c0_i32_0 = arith.constant 0 : i32
    return %arg0, %c0_i32, %0 : i32, i32, i32
  }
}

</mosaic_0001>

<llo_original>
// kernel: gc_attn_forward.1
$region0: #{gc_attn_forward.1}
  #allocation0 [shape = 'u32[]', space=smem, size = 0x4, offset = 0x4, fixed_abs, tag = 'smem constant byte address 0x4 - core index']
  #allocation1 [shape = 'u32[144,128]{1,0:T(1,128)}', space=vmem, size = 0x12000, scoped, tag = 'internal scratch']
  #allocation2 [shape = 'f32[1,1]{1,0:T(1,128)}', space=vmem, size = 0x200, scoped, tag = 'scratch operand']
  #allocation3 [shape = 'f32[1,1]{1,0:T(1,128)}', space=vmem, size = 0x200, scoped, tag = 'scratch operand']
  #allocation4 [shape = 'f32[4,1]{1,0:T(4,128)}', space=vmem, size = 0x800, scoped, tag = 'scratch operand']
  #allocation5 [shape = 'f32[4,1]{1,0:T(4,128)}', space=vmem, size = 0x800, scoped, tag = 'scratch operand']
  #allocation6 [shape = 'f32[4,1]{1,0:T(4,128)}', space=vmem, size = 0x800, scoped, tag = 'scratch operand']
  #allocation7 [shape = 'f32[1]{0:T(128)S(6)}', space=smem, size = 0x200, scoped, tag = 'scoped memory for gc_attn_forward.1']
  %s0 = inlined_call_operand.<no memory space> [shape: f32[1], index: 0, kind: input, shape index: {}]
  %s1 = inlined_call_operand.vmem [shape: f32[2,4,256], index: 1, kind: input, shape index: {}]
  %s2 = inlined_call_operand.vmem [shape: f32[4,1], index: 2, kind: input, shape index: {}]
  %s3 = inlined_call_operand.vmem [shape: f32[2,4,4], index: 3, kind: input, shape index: {}]
  %s4 = inlined_call_operand.vmem [shape: f32[2,4,4], index: 4, kind: input, shape index: {}]
  %s5 = inlined_call_operand.vmem [shape: f32[2,3,4], index: 5, kind: input, shape index: {}]
  %s6 = inlined_call_operand.vmem [shape: f32[2,4,1], index: 6, kind: input, shape index: {}]
  %s7 = inlined_call_operand.vmem [shape: f32[2,4,256], index: 7, kind: output, shape index: {}]
  %s8 = sld [smem:[#allocation0]]
  $region77: #{gc_attn_forward.1} parent=0
    _
  %s10 = ssub.s32 1, %s8
  %s11 = scalar_select 0, %s10, %s8
  %12 = sst [smem:[#allocation7]] %s0
  loop: start=0, step=1, limit=6
  $region2: #{gc_attn_forward.1} parent=0 // loop_pre_header
    _
  $region3: #{gc_attn_forward.1} parent=0 // loop_header
    %s14 = sphi 0, %s18
    %p15 = scmp.ge.s32.totalorder %s14, 6
    %s21 = sphi 0, %s40
    %s22 = sphi 0, %s36
    %s23 = sphi 0, %s32
    %s24 = sphi 0, %s21
    %s25 = sphi 0, %s22
    %s26 = sphi 0, %s23
    %s27 = sphi 0, %s24
    %s28 = sphi 0, %s25
    %s29 = sphi 0, %s26
    %s41 = sphi 0, %s41
    %s43 = sphi 0, %s41
    %s44 = sphi 0, %s43
    %s58 = sphi 0, %s44
    %s66 = sphi 0, %s68
    %s69 = sphi 0, %s66
    %s70 = sphi 0, %s69
    %s86 = sphi 0, %s70
    %s90 = sphi 0, %s90
    %s92 = sphi 0, %s90
    %s93 = sphi 0, %s92
    %s107 = sphi 0, %s93
    %s111 = sphi 0, %s111
    %s113 = sphi 0, %s111
    %s114 = sphi 0, %s113
    %s128 = sphi 0, %s114
    %s132 = sphi 0, %s132
    %s134 = sphi 0, %s132
    %s135 = sphi 0, %s134
    %s149 = sphi 0, %s135
    %s153 = sphi 0, %s153
    %s155 = sphi 0, %s153
    %s156 = sphi 0, %s155
    %s170 = sphi 0, %s156
    %s174 = sphi 0, %s174
    %s176 = sphi 0, %s174
    %s177 = sphi 0, %s176
    %s191 = sphi 0, %s177
    %s201 = sphi 0, %s203
    %s204 = sphi 0, %s201
    %s205 = sphi 0, %s204
    %s221 = sphi 0, %s205
  $region4: #{gc_attn_forward.1} parent=0 // loop_header_branch
    %17 = sbr.rel (%p15) target = $region8
  $region5: #{gc_attn_forward.1} parent=0 // loop_body
    %s19 = ssub.s32 %s14, 1
    %s20 = ssub.s32 %s14, 2
    %s30 = sadd.s32 1, %s23
    %p31 = scmp.ge.s32.totalorder %s30, 1
    %s32 = scalar_select %p31, 0, %s30
    %s33 = sadd.s32 1, %s22
    %s34 = scalar_select %p31, %s33, %s22
    %p35 = scmp.ge.s32.totalorder %s34, 2
    %s36 = scalar_select %p35, 0, %s34
    %s37 = sadd.s32 1, %s21
    %s38 = scalar_select %p35, %s37, %s21
    %p39 = scmp.ge.s32.totalorder %s38, 2
    %s40 = scalar_select %p39, 0, %s38
    %s42 = sadd.s32 %s41, 1
    %p45 = scmp.eq.s32.totalorder %s14, 3
    %p46 = scmp.ne.s32.totalorder %s41, %s43
    %p47 = scmp.eq.s32.totalorder %s14, 0
    %p48 = por %p46, %p47
    %p49 = scmp.ne.s32.totalorder %s41, %s43
    %p50 = scmp.eq.s32.totalorder %s19, 3
    %p51 = por %p49, %p50
    %p52 = scmp.ne.s32.totalorder %s43, %s44
    %p53 = scmp.eq.s32.totalorder %s19, 0
    %p54 = por %p52, %p53
    %p55 = scmp.ne.s32.totalorder %s43, %s44
    %p56 = scmp.eq.s32.totalorder %s20, 3
    %p57 = por %p55, %p56
    %p59 = scmp.ne.s32.totalorder %s44, %s58
    %p60 = scmp.eq.s32.totalorder %s20, 0
    %p61 = por %p59, %p60
    %s62 = ssub.s32 %s21, %s40
    %s63 = ssub.s32 %s23, %s32
    %s64 = sor.u32 %s62, %s63
    %p65 = scmp.eq.s32.totalorder %s64, 0
    %s67 = sadd.s32 %s66, 1
    %s68 = scalar_select %p65, %s66, %s67
    %p71 = pneg %p65
    %p72 = scmp.eq.s32.totalorder %s14, 3
    %p73 = por %p71, %p72
    %p74 = scmp.ne.s32.totalorder %s66, %s69
    %p75 = scmp.eq.s32.totalorder %s14, 0
    %p76 = por %p74, %p75
    %p77 = scmp.ne.s32.totalorder %s66, %s69
    %p78 = scmp.eq.s32.totalorder %s19, 3
    %p79 = por %p77, %p78
    %p80 = scmp.ne.s32.totalorder %s69, %s70
    %p81 = scmp.eq.s32.totalorder %s19, 0
    %p82 = por %p80, %p81
    %p83 = scmp.ne.s32.totalorder %s69, %s70
    %p84 = scmp.eq.s32.totalorder %s20, 3
    %p85 = por %p83, %p84
    %p87 = scmp.ne.s32.totalorder %s70, %s86
    %p88 = scmp.eq.s32.totalorder %s20, 0
    %p89 = por %p87, %p88
    %s91 = sadd.s32 %s90, 1
    %p94 = scmp.eq.s32.totalorder %s14, 3
    %p95 = scmp.ne.s32.totalorder %s90, %s92
    %p96 = scmp.eq.s32.totalorder %s14, 0
    %p97 = por %p95, %p96
    %p98 = scmp.ne.s32.totalorder %s90, %s92
    %p99 = scmp.eq.s32.totalorder %s19, 3
    %p100 = por %p98, %p99
    %p101 = scmp.ne.s32.totalorder %s92, %s93
    %p102 = scmp.eq.s32.totalorder %s19, 0
    %p103 = por %p101, %p102
    %p104 = scmp.ne.s32.totalorder %s92, %s93
    %p105 = scmp.eq.s32.totalorder %s20, 3
    %p106 = por %p104, %p105
    %p108 = scmp.ne.s32.totalorder %s93, %s107
    %p109 = scmp.eq.s32.totalorder %s20, 0
    %p110 = por %p108, %p109
    %s112 = sadd.s32 %s111, 1
    %p115 = scmp.eq.s32.totalorder %s14, 3
    %p116 = scmp.ne.s32.totalorder %s111, %s113
    %p117 = scmp.eq.s32.totalorder %s14, 0
    %p118 = por %p116, %p117
    %p119 = scmp.ne.s32.totalorder %s111, %s113
    %p120 = scmp.eq.s32.totalorder %s19, 3
    %p121 = por %p119, %p120
    %p122 = scmp.ne.s32.totalorder %s113, %s114
    %p123 = scmp.eq.s32.totalorder %s19, 0
    %p124 = por %p122, %p123
    %p125 = scmp.ne.s32.totalorder %s113, %s114
    %p126 = scmp.eq.s32.totalorder %s20, 3
    %p127 = por %p125, %p126
    %p129 = scmp.ne.s32.totalorder %s114, %s128
    %p130 = scmp.eq.s32.totalorder %s20, 0
    %p131 = por %p129, %p130
    %s133 = sadd.s32 %s132, 1
    %p136 = scmp.eq.s32.totalorder %s14, 3
    %p137 = scmp.ne.s32.totalorder %s132, %s134
    %p138 = scmp.eq.s32.totalorder %s14, 0
    %p139 = por %p137, %p138
    %p140 = scmp.ne.s32.totalorder %s132, %s134
    %p141 = scmp.eq.s32.totalorder %s19, 3
    %p142 = por %p140, %p141
    %p143 = scmp.ne.s32.totalorder %s134, %s135
    %p144 = scmp.eq.s32.totalorder %s19, 0
    %p145 = por %p143, %p144
    %p146 = scmp.ne.s32.totalorder %s134, %s135
    %p147 = scmp.eq.s32.totalorder %s20, 3
    %p148 = por %p146, %p147
    %p150 = scmp.ne.s32.totalorder %s135, %s149
    %p151 = scmp.eq.s32.totalorder %s20, 0
    %p152 = por %p150, %p151
    %s154 = sadd.s32 %s153, 1
    %p157 = scmp.eq.s32.totalorder %s14, 3
    %p158 = scmp.ne.s32.totalorder %s153, %s155
    %p159 = scmp.eq.s32.totalorder %s14, 0
    %p160 = por %p158, %p159
    %p161 = scmp.ne.s32.totalorder %s153, %s155
    %p162 = scmp.eq.s32.totalorder %s19, 3
    %p163 = por %p161, %p162
    %p164 = scmp.ne.s32.totalorder %s155, %s156
    %p165 = scmp.eq.s32.totalorder %s19, 0
    %p166 = por %p164, %p165
    %p167 = scmp.ne.s32.totalorder %s155, %s156
    %p168 = scmp.eq.s32.totalorder %s20, 3
    %p169 = por %p167, %p168
    %p171 = scmp.ne.s32.totalorder %s156, %s170
    %p172 = scmp.eq.s32.totalorder %s20, 0
    %p173 = por %p171, %p172
    %s175 = sadd.s32 %s174, 1
    %p178 = scmp.eq.s32.totalorder %s14, 3
    %p179 = scmp.ne.s32.totalorder %s174, %s176
    %p180 = scmp.eq.s32.totalorder %s14, 0
    %p181 = por %p179, %p180
    %p182 = scmp.ne.s32.totalorder %s174, %s176
    %p183 = scmp.eq.s32.totalorder %s19, 3
    %p184 = por %p182, %p183
    %p185 = scmp.ne.s32.totalorder %s176, %s177
    %p186 = scmp.eq.s32.totalorder %s19, 0
    %p187 = por %p185, %p186
    %p188 = scmp.ne.s32.totalorder %s176, %s177
    %p189 = scmp.eq.s32.totalorder %s20, 3
    %p190 = por %p188, %p189
    %p192 = scmp.ne.s32.totalorder %s177, %s191
    %p193 = scmp.eq.s32.totalorder %s20, 0
    %p194 = por %p192, %p193
    %s195 = smul.u32 %s22, %s23
    %s196 = smul.u32 %s36, %s32
    %s197 = ssub.s32 %s21, %s40
    %s198 = ssub.s32 %s195, %s196
    %s199 = sor.u32 %s197, %s198
    %p200 = scmp.eq.s32.totalorder %s199, 0
    %s202 = sadd.s32 %s201, 1
    %s203 = scalar_select %p200, %s201, %s202
    %p206 = pneg %p200
    %p207 = scmp.eq.s32.totalorder %s14, 3
    %p208 = por %p206, %p207
    %p209 = scmp.ne.s32.totalorder %s201, %s204
    %p210 = scmp.eq.s32.totalorder %s14, 0
    %p211 = por %p209, %p210
    %p212 = scmp.ne.s32.totalorder %s201, %s204
    %p213 = scmp.eq.s32.totalorder %s19, 3
    %p214 = por %p212, %p213
    %p215 = scmp.ne.s32.totalorder %s204, %s205
    %p216 = scmp.eq.s32.totalorder %s19, 0
    %p217 = por %p215, %p216
    %p218 = scmp.ne.s32.totalorder %s204, %s205
    %p219 = scmp.eq.s32.totalorder %s20, 3
    %p220 = por %p218, %p219
    %p222 = scmp.ne.s32.totalorder %s205, %s221
    %p223 = scmp.eq.s32.totalorder %s20, 0
    %p224 = por %p222, %p223
    %p225 = scmp.le.s32.totalorder 1, %s14
    %p226 = scmp.lt.s32.totalorder %s14, 5
    %p227 = pnand %p225, %p226
    %p228 = pneg %p227
    // Predicated region
    $region9: #{gc_attn_forward.1} parent=5 // pred_check
      _
    $region10: #{gc_attn_forward.1} parent=5 // pred_check_branch
      %230 = sbr.rel (%p227) target = $region12
    $region11: #{gc_attn_forward.1} parent=5 // pred_region
      %s231 = ssub.s32 %s14, 1
      // Predicated region
      $region13: #{gc_attn_forward.1} parent=11 // pred_check
        %p232 = pneg %p54
      $region14: #{gc_attn_forward.1} parent=11 // pred_check_branch
        %234 = sbr.rel (%p232) target = $region16
      $region15: #{gc_attn_forward.1} parent=11 // pred_region
        _
      $region16: #{gc_attn_forward.1} parent=11 // pred_fallthru
        _
      // Predicated region
      $region17: #{gc_attn_forward.1} parent=11 // pred_check
        %p235 = pneg %p103
      $region18: #{gc_attn_forward.1} parent=11 // pred_check_branch
        %237 = sbr.rel (%p235) target = $region20
      $region19: #{gc_attn_forward.1} parent=11 // pred_region
        _
      $region20: #{gc_attn_forward.1} parent=11 // pred_fallthru
        _
      // Predicated region
      $region21: #{gc_attn_forward.1} parent=11 // pred_check
        %p238 = pneg %p124
      $region22: #{gc_attn_forward.1} parent=11 // pred_check_branch
        %240 = sbr.rel (%p238) target = $region24
      $region23: #{gc_attn_forward.1} parent=11 // pred_region
        _
      $region24: #{gc_attn_forward.1} parent=11 // pred_fallthru
        _
      // Predicated region
      $region25: #{gc_attn_forward.1} parent=11 // pred_check
        %p241 = pneg %p145
      $region26: #{gc_attn_forward.1} parent=11 // pred_check_branch
        %243 = sbr.rel (%p241) target = $region28
      $region27: #{gc_attn_forward.1} parent=11 // pred_region
        _
      $region28: #{gc_attn_forward.1} parent=11 // pred_fallthru
        _
      // Predicated region
      $region29: #{gc_attn_forward.1} parent=11 // pred_check
        %p244 = pneg %p166
      $region30: #{gc_attn_forward.1} parent=11 // pred_check_branch
        %246 = sbr.rel (%p244) target = $region32
      $region31: #{gc_attn_forward.1} parent=11 // pred_region
        _
      $region32: #{gc_attn_forward.1} parent=11 // pred_fallthru
        _
      // Predicated region
      $region33: #{gc_attn_forward.1} parent=11 // pred_check
        %p247 = pneg %p187
      $region34: #{gc_attn_forward.1} parent=11 // pred_check_branch
        %249 = sbr.rel (%p247) target = $region36
      $region35: #{gc_attn_forward.1} parent=11 // pred_region
        _
      $region36: #{gc_attn_forward.1} parent=11 // pred_fallthru
        _
    $region12: #{gc_attn_forward.1} parent=5 // pred_fallthru
      _
    %p250 = scmp.lt.s32.totalorder %s14, 4
    // Predicated region
    $region37: #{gc_attn_forward.1} parent=5 // pred_check
      %p251 = pneg %p250
    $region38: #{gc_attn_forward.1} parent=5 // pred_check_branch
      %253 = sbr.rel (%p251) target = $region40
    $region39: #{gc_attn_forward.1} parent=5 // pred_region
      // Predicated region
      $region41: #{gc_attn_forward.1} parent=39 // pred_check
        %p254 = pneg %p76
      $region42: #{gc_attn_forward.1} parent=39 // pred_check_branch
        %256 = sbr.rel (%p254) target = $region44
      $region43: #{gc_attn_forward.1} parent=39 // pred_region
        %s257 = smul.u32 2, %s23
        %p258 = scmp.lt.s32.totalorder %s21, 1
        %s259 = scalar_select %p258, %s21, 1
        %p260 = scmp.lt.s32.totalorder %s257, 1
        %s261 = scalar_select %p260, %s257, 1
        %s262 = smul.addr %s259, 2
        %s263 = sadd.s32 %s261, %s262
        %s264 = smul.addr %s263, 4
        %s265 = scalar_lea.vmem %s1, %s264
        %s266 = smul.u32 2, %s23
      $region44: #{gc_attn_forward.1} parent=39 // pred_fallthru
        _
    $region40: #{gc_attn_forward.1} parent=5 // pred_fallthru
      _
    %p267 = scmp.le.s32.totalorder 1, %s14
    %p268 = scmp.lt.s32.totalorder %s14, 5
    %p269 = pnand %p267, %p268
    %p270 = pneg %p269
    // Predicated region
    $region45: #{gc_attn_forward.1} parent=5 // pred_check
      _
    $region46: #{gc_attn_forward.1} parent=5 // pred_check_branch
      %272 = sbr.rel (%p269) target = $region48
    $region47: #{gc_attn_forward.1} parent=5 // pred_region
      %s273 = ssub.s32 %s14, 1
      %p274 = pneg %p54
      %p275 = pneg %p51
      %s276 = smul.u32 2, %s26
      %p277 = scmp.lt.s32.totalorder %s24, 1
      %s278 = scalar_select %p277, %s24, 1
      %p279 = scmp.lt.s32.totalorder %s276, 1
      %s280 = scalar_select %p279, %s276, 1
      %s281 = smul.addr %s278, 2
      %s282 = sadd.s32 %s280, %s281
      %s283 = smul.addr %s282, 4
      %s284 = scalar_lea.vmem %s1, %s283
      %p285 = pneg %p82
      %p286 = pneg %p79
      %p287 = pneg %p103
      %p288 = pneg %p100
      %p289 = pneg %p124
      %p290 = pneg %p121
      %p291 = pneg %p145
      %p292 = pneg %p142
      %p293 = pneg %p166
      %p294 = pneg %p163
      %p295 = pneg %p187
      %p296 = pneg %p184
      %p297 = pneg %p217
      %p298 = pneg %p214
      %s299 = smul.u32 %s25, %s26
      %s300 = smul.u32 2, %s299
      %p301 = scmp.lt.s32.totalorder %s24, 1
      %s302 = scalar_select %p301, %s24, 1
      %p303 = scmp.lt.s32.totalorder %s300, 1
      %s304 = scalar_select %p303, %s300, 1
      %s305 = smul.addr %s302, 2
      %s306 = sadd.s32 %s304, %s305
      %s307 = smul.addr %s306, 4
      %s308 = scalar_lea.vmem %s7, %s307
      %s309 = smul.u32 2, %s26
      %p310 = scmp.lt.s32.totalorder %s24, 1
      %s311 = scalar_select %p310, %s24, 1
      %p312 = scmp.lt.s32.totalorder %s309, 1
      %s313 = scalar_select %p312, %s309, 1
      %s314 = smul.addr %s311, 2
      %s315 = sadd.s32 %s313, %s314
      %s316 = smul.addr %s315, 4
      %s317 = scalar_lea.vmem %s1, %s316
      %s318 = smul.u32 2, %s26
      %s319 = smul.u32 %s25, %s26
      %s320 = smul.u32 2, %s319
      %p321 = scmp.lt.s32.totalorder %s24, 1
      %s322 = scalar_select %p321, %s24, 1
      %p323 = scmp.lt.s32.totalorder %s320, 1
      %s324 = scalar_select %p323, %s320, 1
      %s325 = smul.addr %s322, 2
      %s326 = sadd.s32 %s324, %s325
      %s327 = smul.addr %s326, 4
      %s328 = scalar_lea.vmem %s7, %s327
      %s329 = smul.u32 %s25, %s26
      %s330 = smul.u32 2, %s329
      %v331 = vld [vmem:[%s317] sm:$0xff]
      %p332 = scmp.eq.s32.totalorder %s25, 0
      // Predicated region
      $region49: #{gc_attn_forward.1} parent=47 // pred_check
        %p333 = pneg %p332
      $region50: #{gc_attn_forward.1} parent=47 // pred_check_branch
        %335 = sbr.rel (%p333) target = $region52
      $region51: #{gc_attn_forward.1} parent=47 // pred_region
        %p336 = scmp.eq.s32.totalorder %s26, 0
        // Predicated region
        $region53: #{gc_attn_forward.1} parent=51 // pred_check
          %p337 = pneg %p336
        $region54: #{gc_attn_forward.1} parent=51 // pred_check_branch
          %339 = sbr.rel (%p337) target = $region56
        $region55: #{gc_attn_forward.1} parent=51 // pred_region
          %vm340 = vcmask 0
          %341 = vst.msk [vmem:[#allocation2] sm:$0x1] %vm340, -inf
          %342 = vst.msk [vmem:[#allocation3] sm:$0x1] %vm340, 0.0
          %vm343 = vcmask 3072
          %344 = vst.msk [vmem:[#allocation4] sm:$0xf] %vm343, 0.0
        $region56: #{gc_attn_forward.1} parent=51 // pred_fallthru
          _
        %v345 = vld [vmem:[%s2] sm:$0xf]
        %347 = vset.pattern.permute.xlu0 0
        %348 = vperm.xlu0 %347, %v345
        %v349 = vpop.permute.xlu0 %348
        %v351 = vunpack.c.l.s4 839922192
        %v352 = vunpack.c.0.s8 %v351
        %v353 = vlaneseq
        %v354 = vshrl.u32 %v353, 7
        %v355 = vsub.s32 %v352, %v354
        %v356 = vrot.slane %v349, %v355
        %v358 = vmul.f32 %v331, %v356
        %v360 = vcombine.high %v358, %v358
        %vm362 = vcmask 1043456
        %v363 = vsel %vm362, %v358, 0.0
        %v364 = vrot.slane %v363, 4
        %v365 = vadd.f32 %v363, %v364
        %v366 = vrot.slane %v365, 2
        %v367 = vadd.f32 %v365, %v366
        %v368 = vrot.slane %v367, 1
        %v369 = vadd.f32 %v367, %v368
        %v370 = vsel %vm362, %v360, 0.0
        %v371 = vrot.slane %v370, 4
        %v372 = vadd.f32 %v370, %v371
        %v373 = vrot.slane %v372, 2
        %v374 = vadd.f32 %v372, %v373
        %v375 = vrot.slane %v374, 1
        %v376 = vadd.f32 %v374, %v375
        %s377 = sld [smem:[#allocation7]]
        %v378 = vstv %s377
        %v379 = vadd.f32 %v369, %v378
        %v380 = vadd.f32 %v376, %v378
        %v381 = vld [vmem:[#allocation2] sm:$0x1]
        %v382 = vmax.f32 %v379, %v380
        %383 = vmax.xlane.f32.xlu0 %v382
        %v384 = vpop.xlane.xlu0 %383
        %v385 = vmax.f32 %v381, %v384
        %v386 = vsub.f32 %v381, %v385
        %v387 = vmul.f32 %v386, 1.442695
        %v388 = vpow.pop %v387
        %390 = vset.pattern.permute.xlu0 0
        %391 = vperm.xlu0 %390, %v385
        %v392 = vpop.permute.xlu0 %391
        %v394 = vlaneseq
        %v395 = vshrl.u32 %v394, 7
        %v396 = vsub.s32 0, %v395
        %v397 = vrot.slane %v392, %v396
        %v398 = vsub.f32 %v379, %v397
        %v399 = vsub.f32 %v380, %v397
        %v400 = vmul.f32 %v398, 1.442695
        %v401 = vpow.pop %v400
        %v402 = vmul.f32 %v399, 1.442695
        %v403 = vpow.pop %v402
        %v404 = vld [vmem:[#allocation3] sm:$0x1]
        %v405 = vmul.f32 %v388, %v404
        %v406 = vadd.f32 %v401, %v403
        %407 = vadd.xlane.f32.xlu0 %v406
        %v408 = vpop.xlane.xlu0 %407
        %v409 = vadd.f32 %v405, %v408
        %vm410 = vcmask 0
        %411 = vst.msk [vmem:[#allocation3] sm:$0x1] %vm410, %v409
        %v412 = vld [vmem:[#allocation4] sm:$0xf]
        %v414 = vlaneseq
        %v415 = vshrl.u32 %v414, 7
        %v416 = vsub.s32 0, %v415
        %v417 = vrot.slane %v388, %v416
        %v419 = vmul.f32 %v417, %v412
        %v422 = vcombine.low %v401, %v403
        %v424 = vmul.f32 %v331, %v422
        %v426 = vcombine.high %v424, %v424
        %v428 = vsel %vm362, %v424, 0.0
        %v429 = vsel %vm362, %v426, 0.0
        %v430 = vadd.f32 %v428, %v429
        %431 = vadd.xlane.f32.xlu0 %v430
        %v432 = vpop.xlane.xlu0 %431
        %v433 = vadd.f32 %v419, %v432
        %vm434 = vcmask 3072
        %435 = vst.msk [vmem:[#allocation4] sm:$0xf] %vm434, %v433
        %436 = vst.msk [vmem:[#allocation2] sm:$0x1] %vm410, %v385
        // Predicated region
        $region57: #{gc_attn_forward.1} parent=51 // pred_check
          %p437 = pneg %p336
        $region58: #{gc_attn_forward.1} parent=51 // pred_check_branch
          %439 = sbr.rel (%p437) target = $region60
        $region59: #{gc_attn_forward.1} parent=51 // pred_region
          %v440 = vld [vmem:[#allocation4] sm:$0xf]
          %v441 = vld [vmem:[#allocation3] sm:$0x1]
          %v442 = vrcp.pop %v441
          %v443 = vmul.f32 1.0, %v442
          %v445 = vlaneseq
          %v446 = vshrl.u32 %v445, 7
          %v447 = vsub.s32 0, %v446
          %v448 = vrot.slane %v443, %v447
          %v450 = vmul.f32 %v440, %v448
          %v451 = vld [vmem:[%s3] sm:$0xf]
          %v452 = vld [vmem:[%s4] sm:$0xf]
          %v453 = vld [vmem:[%s6] sm:$0xf]
          %v454 = vld [vmem:[%s5] sm:$0x7]
          %456 = vset.pattern.permute.xlu0 0
          %457 = vperm.xlu0 %456, %v450
          %v458 = vpop.permute.xlu0 %457
          %v460 = vmul.f32 %v451, %v458
          %vm461 = vcmask 27648
          %v462 = vsel %vm461, %v460, 0.0
          %v463 = vrot.slane %v462, 4
          %v464 = vadd.f32 %v462, %v463
          %v465 = vrot.slane %v464, 2
          %v466 = vadd.f32 %v464, %v465
          %v467 = vrot.slane %v466, 1
          %v468 = vadd.f32 %v466, %v467
          %v469 = vadd.f32 %v468, %v454
          %vm470 = vcmask 24576
          %v471 = vsel %vm470, %v469, 0.0
          %472 = vadd.xlane.f32.xlu0 %v471
          %v473 = vpop.xlane.xlu0 %472
          %v474 = vrcp.pop 4.0
          %v475 = vmul.f32 %v473, %v474
          %v476 = vsub.f32 %v469, %v475
          %v477 = vmul.f32 %v476, %v476
          %v478 = vsel %vm470, %v477, 0.0
          %479 = vadd.xlane.f32.xlu0 %v478
          %v480 = vpop.xlane.xlu0 %479
          %v481 = vmul.f32 %v480, %v474
          %v482 = vadd.f32 %v481, 1e-05
          %v483 = vrsqrt.pop %v482
          %v484 = vmul.f32 %v476, %v483
          %v486 = vrot.slane %v454, 1
          %v488 = vmul.f32 %v484, %v486
          %v489 = vrot.slane %v454, 2
          %v491 = vadd.f32 %v488, %v489
          %v492 = vmax.f32 %v491, 0.0
          %v493 = vlaneseq
          %v494 = vshrl.u32 %v493, 7
          %v495 = vsub.s32 0, %v494
          %v496 = vrot.slane %v492, %v495
          %v497 = vmul.f32 %v452, %v496
          %v498 = vsel %vm461, %v497, 0.0
          %499 = vadd.xlane.f32.xlu0 %v498
          %v500 = vpop.xlane.xlu0 %499
          %v501 = vadd.f32 %v500, %v453
          %502 = vst.msk [vmem:[#allocation5] sm:$0xf] %vm434, %v501
          %s503 = scalar_lea.vmem %s3, 4
          %v504 = vld [vmem:[%s503] sm:$0xf]
          %s505 = scalar_lea.vmem %s4, 4
          %v506 = vld [vmem:[%s505] sm:$0xf]
          %s507 = scalar_lea.vmem %s6, 4
          %v508 = vld [vmem:[%s507] sm:$0xf]
          %s509 = scalar_lea.vmem %s5, 4
          %v510 = vld [vmem:[%s509] sm:$0x7]
          %v511 = vmul.f32 %v504, %v458
          %v512 = vsel %vm461, %v511, 0.0
          %v513 = vrot.slane %v512, 4
          %v514 = vadd.f32 %v512, %v513
          %v515 = vrot.slane %v514, 2
          %v516 = vadd.f32 %v514, %v515
          %v517 = vrot.slane %v516, 1
          %v518 = vadd.f32 %v516, %v517
          %v519 = vadd.f32 %v518, %v510
          %v520 = vsel %vm470, %v519, 0.0
          %521 = vadd.xlane.f32.xlu0 %v520
          %v522 = vpop.xlane.xlu0 %521
          %v523 = vmul.f32 %v522, %v474
          %v524 = vsub.f32 %v519, %v523
          %v525 = vmul.f32 %v524, %v524
          %v526 = vsel %vm470, %v525, 0.0
          %527 = vadd.xlane.f32.xlu0 %v526
          %v528 = vpop.xlane.xlu0 %527
          %v529 = vmul.f32 %v528, %v474
          %v530 = vadd.f32 %v529, 1e-05
          %v531 = vrsqrt.pop %v530
          %v532 = vmul.f32 %v524, %v531
          %v534 = vrot.slane %v510, 1
          %v536 = vmul.f32 %v532, %v534
          %v537 = vrot.slane %v510, 2
          %v539 = vadd.f32 %v536, %v537
          %v540 = vmax.f32 %v539, 0.0
          %v541 = vlaneseq
          %v542 = vshrl.u32 %v541, 7
          %v543 = vsub.s32 0, %v542
          %v544 = vrot.slane %v540, %v543
          %v545 = vmul.f32 %v506, %v544
          %v546 = vsel %vm461, %v545, 0.0
          %547 = vadd.xlane.f32.xlu0 %v546
          %v548 = vpop.xlane.xlu0 %547
          %v549 = vadd.f32 %v548, %v508
          %v550 = vxor.u32 %v549, 2147483648
          %v551 = vmul.f32 %v550, 1.442695
          %v552 = vpow.pop %v551
          %v553 = vadd.f32 %v552, 1.0
          %v554 = vrcp.pop %v553
          %v555 = vmul.f32 1.0, %v554
          %556 = vst.msk [vmem:[#allocation6] sm:$0xf] %vm434, %v555
        $region60: #{gc_attn_forward.1} parent=51 // pred_fallthru
          _
      $region52: #{gc_attn_forward.1} parent=47 // pred_fallthru
        _
      %p557 = scmp.eq.s32.totalorder %s25, 1
      // Predicated region
      $region61: #{gc_attn_forward.1} parent=47 // pred_check
        %p558 = pneg %p557
      $region62: #{gc_attn_forward.1} parent=47 // pred_check_branch
        %560 = sbr.rel (%p558) target = $region64
      $region63: #{gc_attn_forward.1} parent=47 // pred_region
        %v561 = vld [vmem:[#allocation6] sm:$0xf]
        %563 = vset.pattern.permute.xlu0 0
        %564 = vperm.xlu0 %563, %v561
        %v565 = vpop.permute.xlu0 %564
        %v567 = vunpack.c.l.s4 839922192
        %v568 = vunpack.c.0.s8 %v567
        %v569 = vlaneseq
        %v570 = vshrl.u32 %v569, 7
        %v571 = vsub.s32 %v568, %v570
        %v572 = vrot.slane %v565, %v571
        %v574 = vmul.f32 %v331, %v572
        %v575 = vld [vmem:[#allocation5] sm:$0xf]
        %577 = vset.pattern.permute.xlu0 0
        %578 = vperm.xlu0 %577, %v575
        %v579 = vpop.permute.xlu0 %578
        %v581 = vunpack.c.l.s4 839922192
        %v582 = vunpack.c.0.s8 %v581
        %v583 = vlaneseq
        %v584 = vshrl.u32 %v583, 7
        %v585 = vsub.s32 %v582, %v584
        %v586 = vrot.slane %v579, %v585
        %v588 = vadd.f32 %v574, %v586
        %589 = vst [vmem:[%s328] sm:$0xff] %v588
      $region64: #{gc_attn_forward.1} parent=47 // pred_fallthru
        _
      %s590 = smul.u32 %s25, %s26
      %s591 = smul.u32 2, %s590
      %p592 = scmp.lt.s32.totalorder %s24, 1
      %s593 = scalar_select %p592, %s24, 1
      %p594 = scmp.lt.s32.totalorder %s591, 1
      %s595 = scalar_select %p594, %s591, 1
      %s596 = smul.addr %s593, 2
      %s597 = sadd.s32 %s595, %s596
      %s598 = smul.addr %s597, 4
      %s599 = scalar_lea.vmem %s7, %s598
      // Predicated region
      $region65: #{gc_attn_forward.1} parent=47 // pred_check
        %p600 = pneg %p214
      $region66: #{gc_attn_forward.1} parent=47 // pred_check_branch
        %602 = sbr.rel (%p600) target = $region68
      $region67: #{gc_attn_forward.1} parent=47 // pred_region
        %s603 = smul.u32 %s25, %s26
        %s604 = smul.u32 2, %s603
      $region68: #{gc_attn_forward.1} parent=47 // pred_fallthru
        _
    $region48: #{gc_attn_forward.1} parent=5 // pred_fallthru
      _
    %p605 = scmp.le.s32.totalorder 2, %s14
    // Predicated region
    $region69: #{gc_attn_forward.1} parent=5 // pred_check
      %p606 = pneg %p605
    $region70: #{gc_attn_forward.1} parent=5 // pred_check_branch
      %608 = sbr.rel (%p606) target = $region72
    $region71: #{gc_attn_forward.1} parent=5 // pred_region
      %s609 = ssub.s32 %s14, 2
      // Predicated region
      $region73: #{gc_attn_forward.1} parent=71 // pred_check
        %p610 = pneg %p220
      $region74: #{gc_attn_forward.1} parent=71 // pred_check_branch
        %612 = sbr.rel (%p610) target = $region76
      $region75: #{gc_attn_forward.1} parent=71 // pred_region
        %s613 = smul.u32 %s28, %s29
        %s614 = smul.u32 2, %s613
        %p615 = scmp.lt.s32.totalorder %s27, 1
        %s616 = scalar_select %p615, %s27, 1
        %p617 = scmp.lt.s32.totalorder %s614, 1
        %s618 = scalar_select %p617, %s614, 1
        %s619 = smul.addr %s616, 2
        %s620 = sadd.s32 %s618, %s619
        %s621 = smul.addr %s620, 4
        %s622 = scalar_lea.vmem %s7, %s621
      $region76: #{gc_attn_forward.1} parent=71 // pred_fallthru
        _
    $region72: #{gc_attn_forward.1} parent=5 // pred_fallthru
      _
  $region6: #{gc_attn_forward.1} parent=0 // loop_footer
    %s18 = sadd.s32 1, %s14
  $region7: #{gc_attn_forward.1} parent=0 // loop_footer_branch
    %13 = sbr.rel target = $region3
  $region8: #{gc_attn_forward.1} parent=0 // loop_exit
    _

</llo_original>
